<compile_context>
chip_gen: v6e
topology: v6e:2x2x1
jax: 0.10.0
libtpu: 0.0.40
codegen_flags: <defaults>
</compile_context>

<pallas_src>
import jax
import jax.numpy as jnp
from jax import lax
from jax.experimental import pallas as pl
from jax.experimental.pallas import tpu as pltpu


# ------------------------------ fused attention kernel ------------------------------ #
def _attention_kernel(x_ref, h_ref, fcw_ref, fcb_ref, whb_ref, bhb_ref, o_ref):
    """One sequence per grid step.

    x_ref  : (1, T, H)  lstm_output for this sequence
    h_ref  : (1, 1, H)  lstm_hidden row for this sequence
    fcw_ref: (H, H)     fc weight, pre-transposed so `x @ fcw` == nn.Linear(x)
    fcb_ref: (1, H)     fc bias
    whb_ref: (H, H)     folded hidden-chain weight  fc_w^T @ W0^T
    bhb_ref: (1, H)     folded hidden-chain bias    fc_b  @ W0^T
    o_ref  : (1, 1, H)  attention output row
    """
    x = x_ref[0]                                                    # (T, H)
    h = h_ref[0]                                                    # (1, H)

    # fc() on every timestep of this sequence: one MXU matmul (no in-kernel reshape).
    o2d = jnp.dot(x, fcw_ref[...],
                  preferred_element_type=jnp.float32) + fcb_ref[...]           # (T, H) f32

    # Folded hidden branch: u = fc(h) @ W0^T in a single MXU matmul (h_proj eliminated).
    u = jnp.dot(h, whb_ref[...],
                preferred_element_type=jnp.float32) + bhb_ref[...]             # (1, H) f32

    # Bilinear score on the MXU: s[t] = o2d[t, :] . u  -> (T, 1).
    # TODO(synk): the reference module's literal nn.Bilinear call is shape-invalid
    # ((B,T,H) vs (B,H,1)); we implement the intended per-timestep bilinear score with the
    # projected hidden state broadcast over the time axis (matches the JAX reference).
    s = lax.dot_general(o2d, u, (((1,), (1,)), ((), ())),
                        preferred_element_type=jnp.float32)                    # (T, 1)

    # Softmax over the time axis (dim=1 in the PyTorch module).  The bilinear bias is
    # omitted: softmax is shift-invariant per row, so it cannot change the result.
    s = s - jnp.max(s, axis=0, keepdims=True)
    e = jnp.exp(s)
    attn = e * pl.reciprocal(jnp.sum(e, axis=0, keepdims=True), approx=True)   # (T, 1)

    # Attention-weighted sum on the MXU: out[h] = sum_t attn[t] * o2d[t, h]  -> (1, H).
    out = lax.dot_general(attn, o2d, (((0,), (0,)), ((), ())),
                          preferred_element_type=jnp.float32)                  # (1, H)
    o_ref[0] = out.astype(o_ref.dtype)
    # TODO(synk): for very long T, switch to an online (flash-style) softmax with T as an
    # inner "arbitrary" grid axis so the full (T, H) projection need not be VMEM-resident.


@jax.jit
def attention_forward(lstm_output, lstm_hidden, params):
    """lstm_output: (B, T, H), lstm_hidden: (1, B, H) -> (B, H)."""
    B, T, H = lstm_output.shape
    act_dt = lstm_output.dtype                          # keep producer dtype (no f32 upcast)
    hidden = lstm_hidden.reshape(B, 1, H).astype(act_dt)  # == .squeeze(0), one row per block

    w0_t = params["bil_w"][0].T                         # (H, H): W0^T
    fc_w_t = params["fc_w"].T.astype(act_dt)            # (H, H): x @ fc_w_t == x @ W^T
    fc_b = params["fc_b"].reshape(1, H).astype(jnp.float32)
    # Fold the hidden-state chain (wrapper-side): u = (h @ fc_w^T + fc_b) @ W0^T
    #                                               = h @ w_hb + b_hb.
    w_hb = (params["fc_w"].T @ w0_t).astype(act_dt)     # (H, H)
    b_hb = (params["fc_b"] @ w0_t).reshape(1, H).astype(jnp.float32)
    # Bilinear bias intentionally not passed: softmax over T is shift-invariant.

    out = pl.pallas_call(
        _attention_kernel,
        out_shape=jax.ShapeDtypeStruct((B, 1, H), jnp.float32),
        grid=(B,),
        in_specs=[
            pl.BlockSpec((1, T, H), lambda b: (b, 0, 0)),   # one sequence per grid step
            pl.BlockSpec((1, 1, H), lambda b: (b, 0, 0)),   # its hidden-state row
            pl.BlockSpec((H, H), lambda b: (0, 0)),         # weights / biases: constant
            pl.BlockSpec((1, H), lambda b: (0, 0)),         #   index_map -> VMEM-resident,
            pl.BlockSpec((H, H), lambda b: (0, 0)),         #   not re-DMA'd per step
            pl.BlockSpec((1, H), lambda b: (0, 0)),
        ],
        out_specs=pl.BlockSpec((1, 1, H), lambda b: (b, 0, 0)),
        compiler_params=pltpu.CompilerParams(
            # Batch steps are independent -> shard grid steps across both TCs on v7x.
            dimension_semantics=("parallel",),
        ),
    )(lstm_output, hidden, fc_w_t, fc_b, w_hb, b_hb)
    return out.reshape(B, H)


# ------------------------------ params / pure-JAX reference ------------------------------ #
def init_attention_params(key, hidden_size):
    """PyTorch-style uniform(-k, k), k = 1/sqrt(in_features)."""
    k = 1.0 / jnp.sqrt(jnp.float32(hidden_size))
    k1, k2, k3, k4 = jax.random.split(key, 4)
    return {
        "fc_w": jax.random.uniform(k1, (hidden_size, hidden_size), jnp.float32, -k, k),
        "fc_b": jax.random.uniform(k2, (hidden_size,), jnp.float32, -k, k),
        "bil_w": jax.random.uniform(k3, (1, hidden_size, hidden_size), jnp.float32, -k, k),
        "bil_b": jax.random.uniform(k4, (1,), jnp.float32, -k, k),
    }


def attention_reference(lstm_output, lstm_hidden, params):
    B, T, H = lstm_output.shape
    h = lstm_hidden.reshape(B, H) @ params["fc_w"].T + params["fc_b"]
    o = lstm_output @ params["fc_w"].T + params["fc_b"]
    u = h @ params["bil_w"][0].T
    s = jnp.sum(o * u[:, None, :], axis=-1) + params["bil_b"][0]   # bias kept here (no-op)
    a = jax.nn.softmax(s, axis=-1)
    return jnp.sum(o * a[:, :, None], axis=1)


if __name__ == "__main__":
    batch, seq, hidden = 2, 8, 32

    key = jax.random.PRNGKey(0)
    key, kx, kh = jax.random.split(key, 3)
    lstm_output = jax.random.normal(kx, (batch, seq, hidden), jnp.float32)
    lstm_hidden = jax.random.normal(kh, (1, batch, hidden), jnp.float32)

    params = init_attention_params(key, hidden)

    out = attention_forward(lstm_output, lstm_hidden, params)
    jax.block_until_ready(out)

    ref = attention_reference(lstm_output, lstm_hidden, params)
    assert out.shape == (batch, hidden), out.shape
    assert bool(jnp.allclose(out, ref, rtol=2e-2, atol=2e-2)), float(jnp.max(jnp.abs(out - ref)))
    print("KERNEL_OK")
</pallas_src>

<mosaic_0001>
module attributes {stable_mosaic.version = 11 : i64} {
  func.func @_attention_kernel(%arg0: i32, %arg1: memref<1x8x32xf32, #tpu.memory_space<vmem>>, %arg2: memref<1x1x32xf32, #tpu.memory_space<vmem>>, %arg3: memref<32x32xf32, #tpu.memory_space<vmem>>, %arg4: memref<1x32xf32, #tpu.memory_space<vmem>>, %arg5: memref<32x32xf32, #tpu.memory_space<vmem>>, %arg6: memref<1x32xf32, #tpu.memory_space<vmem>>, %arg7: memref<1x1x32xf32, #tpu.memory_space<vmem>>) attributes {dimension_semantics = [#tpu.dimension_semantics<parallel>], iteration_bounds = array<i64: 2>, scalar_prefetch = 0 : i64, scratch_operands = 0 : i64, tpu.core_type = #tpu.core_type<tc>, window_params = [{transform_indices = @transform_0, window_bounds = array<i64: 1, 8, 32>}, {transform_indices = @transform_1, window_bounds = array<i64: 1, 1, 32>}, {pipeline_mode = #tpu.pipeline_mode<synchronous>, transform_indices = @transform_2, window_bounds = array<i64: 32, 32>}, {pipeline_mode = #tpu.pipeline_mode<synchronous>, transform_indices = @transform_3, window_bounds = array<i64: 1, 32>}, {pipeline_mode = #tpu.pipeline_mode<synchronous>, transform_indices = @transform_4, window_bounds = array<i64: 32, 32>}, {pipeline_mode = #tpu.pipeline_mode<synchronous>, transform_indices = @transform_5, window_bounds = array<i64: 1, 32>}, {transform_indices = @transform_6, window_bounds = array<i64: 1, 1, 32>}]} {
    %c0 = arith.constant 0 : index
    %c0_0 = arith.constant 0 : index
    %c0_1 = arith.constant 0 : index
    %0 = vector.load %arg1[%c0, %c0_0, %c0_1] : memref<1x8x32xf32, #tpu.memory_space<vmem>>, vector<1x8x32xf32>
    %1 = vector.shape_cast %0 : vector<1x8x32xf32> to vector<8x32xf32>
    %c0_2 = arith.constant 0 : index
    %c0_3 = arith.constant 0 : index
    %c0_4 = arith.constant 0 : index
    %2 = vector.load %arg2[%c0_2, %c0_3, %c0_4] : memref<1x1x32xf32, #tpu.memory_space<vmem>>, vector<1x1x32xf32>
    %3 = vector.shape_cast %2 : vector<1x1x32xf32> to vector<1x32xf32>
    %c0_5 = arith.constant 0 : index
    %c0_6 = arith.constant 0 : index
    %4 = vector.load %arg3[%c0_5, %c0_6] : memref<32x32xf32, #tpu.memory_space<vmem>>, vector<32x32xf32>
    %cst = arith.constant dense<0.000000e+00> : vector<8x32xf32>
    %5 = tpu.matmul %1, %4, %cst {dimension_numbers = #tpu.dot_dimension_numbers<[1], [0], [0], [1], [0, 0, 1, 1], [], []>} : vector<8x32xf32>, vector<32x32xf32>, vector<8x32xf32> -> vector<8x32xf32>
    %c0_7 = arith.constant 0 : index
    %c0_8 = arith.constant 0 : index
    %6 = vector.load %arg4[%c0_7, %c0_8] : memref<1x32xf32, #tpu.memory_space<vmem>>, vector<1x32xf32>
    %7 = vector.broadcast %6 : vector<1x32xf32> to vector<8x32xf32>
    %8 = arith.addf %5, %7 : vector<8x32xf32>
    %c0_9 = arith.constant 0 : index
    %c0_10 = arith.constant 0 : index
    %9 = vector.load %arg5[%c0_9, %c0_10] : memref<32x32xf32, #tpu.memory_space<vmem>>, vector<32x32xf32>
    %cst_11 = arith.constant dense<0.000000e+00> : vector<1x32xf32>
    %10 = tpu.matmul %3, %9, %cst_11 {dimension_numbers = #tpu.dot_dimension_numbers<[1], [0], [0], [1], [0, 0, 1, 1], [], []>} : vector<1x32xf32>, vector<32x32xf32>, vector<1x32xf32> -> vector<1x32xf32>
    %c0_12 = arith.constant 0 : index
    %c0_13 = arith.constant 0 : index
    %11 = vector.load %arg6[%c0_12, %c0_13] : memref<1x32xf32, #tpu.memory_space<vmem>>, vector<1x32xf32>
    %12 = arith.addf %10, %11 : vector<1x32xf32>
    %cst_14 = arith.constant dense<0.000000e+00> : vector<8x1xf32>
    %13 = tpu.matmul %8, %12, %cst_14 {dimension_numbers = #tpu.dot_dimension_numbers<[1], [1], [0], [0], [0, 0, 1, 0], [], []>} : vector<8x32xf32>, vector<1x32xf32>, vector<8x1xf32> -> vector<8x1xf32>
    %cst_15 = arith.constant dense<0xFF800000> : vector<1xf32>
    %14 = vector.multi_reduction <maximumf>, %13, %cst_15 [0] : vector<8x1xf32> to vector<1xf32>
    %15 = vector.shape_cast %14 : vector<1xf32> to vector<1x1xf32>
    %16 = vector.broadcast %15 : vector<1x1xf32> to vector<8x1xf32>
    %17 = arith.subf %13, %16 : vector<8x1xf32>
    %18 = math.exp %17 : vector<8x1xf32>
    %cst_16 = arith.constant dense<0.000000e+00> : vector<1xf32>
    %19 = vector.multi_reduction <add>, %18, %cst_16 [0] : vector<8x1xf32> to vector<1xf32>
    %20 = vector.shape_cast %19 : vector<1xf32> to vector<1x1xf32>
    %21 = tpu.reciprocal %20 {approx = true} : vector<1x1xf32> -> vector<1x1xf32>
    %22 = vector.broadcast %21 : vector<1x1xf32> to vector<8x1xf32>
    %23 = arith.mulf %18, %22 : vector<8x1xf32>
    %cst_17 = arith.constant dense<0.000000e+00> : vector<1x32xf32>
    %24 = tpu.matmul %23, %8, %cst_17 {dimension_numbers = #tpu.dot_dimension_numbers<[0], [0], [1], [1], [0, 1, 1, 1], [], []>} : vector<8x1xf32>, vector<8x32xf32>, vector<1x32xf32> -> vector<1x32xf32>
    %c0_18 = arith.constant 0 : index
    %c0_19 = arith.constant 0 : index
    %c0_20 = arith.constant 0 : index
    %25 = vector.load %arg7[%c0_18, %c0_19, %c0_20] : memref<1x1x32xf32, #tpu.memory_space<vmem>>, vector<1x1x32xf32>
    %26 = vector.shape_cast %25 : vector<1x1x32xf32> to vector<1x32xf32>
    %27 = vector.shape_cast %24 : vector<1x32xf32> to vector<1x1x32xf32>
    tpu.vector_store %arg7[%c0_18, %c0_19, %c0_20], %27 {strides = array<i32>} : memref<1x1x32xf32, #tpu.memory_space<vmem>>, vector<1x1x32xf32>,
    return
  }
  func.func @transform_0(%arg0: i32) -> (i32, i32, i32) {
    %c0_i32 = arith.constant 0 : i32
    %c0_i32_0 = arith.constant 0 : i32
    %c0_i32_1 = arith.constant 0 : i32
    return %arg0, %c0_i32, %c0_i32_0 : i32, i32, i32
  }
  func.func @transform_1(%arg0: i32) -> (i32, i32, i32) {
    %c0_i32 = arith.constant 0 : i32
    %c0_i32_0 = arith.constant 0 : i32
    %c0_i32_1 = arith.constant 0 : i32
    return %arg0, %c0_i32, %c0_i32_0 : i32, i32, i32
  }
  func.func @transform_2(%arg0: i32) -> (i32, i32) {
    %c0_i32 = arith.constant 0 : i32
    %c0_i32_0 = arith.constant 0 : i32
    %c0_i32_1 = arith.constant 0 : i32
    return %c0_i32, %c0_i32_0 : i32, i32
  }
  func.func @transform_3(%arg0: i32) -> (i32, i32) {
    %c0_i32 = arith.constant 0 : i32
    %c0_i32_0 = arith.constant 0 : i32
    %c0_i32_1 = arith.constant 0 : i32
    return %c0_i32, %c0_i32_0 : i32, i32
  }
  func.func @transform_4(%arg0: i32) -> (i32, i32) {
    %c0_i32 = arith.constant 0 : i32
    %c0_i32_0 = arith.constant 0 : i32
    %c0_i32_1 = arith.constant 0 : i32
    return %c0_i32, %c0_i32_0 : i32, i32
  }
  func.func @transform_5(%arg0: i32) -> (i32, i32) {
    %c0_i32 = arith.constant 0 : i32
    %c0_i32_0 = arith.constant 0 : i32
    %c0_i32_1 = arith.constant 0 : i32
    return %c0_i32, %c0_i32_0 : i32, i32
  }
  func.func @transform_6(%arg0: i32) -> (i32, i32, i32) {
    %c0_i32 = arith.constant 0 : i32
    %c0_i32_0 = arith.constant 0 : i32
    %c0_i32_1 = arith.constant 0 : i32
    return %arg0, %c0_i32, %c0_i32_0 : i32, i32, i32
  }
}

</mosaic_0001>

<llo_original>
// kernel: attention_forward.1
$region0: #{attention_forward.1}
  #allocation0 [shape = 'u32[]', space=smem, size = 0x4, offset = 0x4, fixed_abs, tag = 'smem constant byte address 0x4 - core index']
  #allocation1 [shape = 'u32[144,128]{1,0:T(1,128)}', space=vmem, size = 0x12000, scoped, tag = 'internal scratch']
  %s0 = inlined_call_operand.vmem [shape: f32[2,8,32], index: 0, kind: input, shape index: {}]
  %s1 = inlined_call_operand.vmem [shape: f32[2,1,32], index: 1, kind: input, shape index: {}]
  %s2 = inlined_call_operand.vmem [shape: f32[32,32], index: 2, kind: input, shape index: {}]
  %s3 = inlined_call_operand.vmem [shape: f32[1,32], index: 3, kind: input, shape index: {}]
  %s4 = inlined_call_operand.vmem [shape: f32[32,32], index: 4, kind: input, shape index: {}]
  %s5 = inlined_call_operand.vmem [shape: f32[1,32], index: 5, kind: input, shape index: {}]
  %s6 = inlined_call_operand.hbm [shape: f32[2,1,32], index: 6, kind: output, shape index: {}]
  %s7 = sld [smem:[#allocation0]]
  $region57: #{attention_forward.1} parent=0
    _
  %s9 = ssub.s32 1, %s7
  %s10 = scalar_select 0, %s9, %s7
  $region1: #{attention_forward.1} parent=0
    #allocation2 [shape = 'u8[1024]{0}', space=vmem, size = 0x400, scoped, tag = 'output window, operand 0']
    #allocation3 [shape = 's32[2]{0}', space=sflag, size = 0x8, scoped, tag = 'scoped memory for attention_forward.1']
    %11 = vsyncpa [#allocation3], 0
    %s12 = scalar_lea.sflag [#allocation3], 1
    %13 = vsyncpa %s12, 0
    loop: start=0, step=1, limit=4
    $region2: #{attention_forward.1} parent=1 // loop_pre_header
      _
    $region3: #{attention_forward.1} parent=1 // loop_header
      %s15 = sphi 0, %s19
      %p16 = scmp.ge.s32.totalorder %s15, 4
      %s25 = sphi 0, %s27
      %s28 = sphi 0, %s25
      %s29 = sphi 0, %s28
      %s45 = sphi 0, %s29
      %s51 = sphi 0, %s53
      %s54 = sphi 0, %s51
      %s55 = sphi 0, %s54
      %s71 = sphi 0, %s55
      %s75 = sphi 0, %s75
      %s77 = sphi 0, %s75
      %s78 = sphi 0, %s77
      %s92 = sphi 0, %s78
      %s96 = sphi 0, %s96
      %s98 = sphi 0, %s96
      %s99 = sphi 0, %s98
      %s113 = sphi 0, %s99
      %s117 = sphi 0, %s117
      %s119 = sphi 0, %s117
      %s120 = sphi 0, %s119
      %s134 = sphi 0, %s120
      %s138 = sphi 0, %s138
      %s140 = sphi 0, %s138
      %s141 = sphi 0, %s140
      %s155 = sphi 0, %s141
      %s161 = sphi 0, %s163
      %s164 = sphi 0, %s161
      %s165 = sphi 0, %s164
      %s181 = sphi 0, %s165
    $region4: #{attention_forward.1} parent=1 // loop_header_branch
      %18 = sbr.rel (%p16) target = $region8
    $region5: #{attention_forward.1} parent=1 // loop_body
      %s20 = ssub.s32 %s15, 1
      %s21 = ssub.s32 %s15, 2
      %s22 = sadd.s32 %s15, 1
      %s23 = ssub.s32 %s15, %s22
      %p24 = scmp.eq.s32.totalorder %s23, 0
      %s26 = sadd.s32 %s25, 1
      %s27 = scalar_select %p24, %s25, %s26
      %p30 = pneg %p24
      %p31 = scmp.eq.s32.totalorder %s15, 1
      %p32 = por %p30, %p31
      %p33 = scmp.ne.s32.totalorder %s25, %s28
      %p34 = scmp.eq.s32.totalorder %s15, 0
      %p35 = por %p33, %p34
      %p36 = scmp.ne.s32.totalorder %s25, %s28
      %p37 = scmp.eq.s32.totalorder %s20, 1
      %p38 = por %p36, %p37
      %p39 = scmp.ne.s32.totalorder %s28, %s29
      %p40 = scmp.eq.s32.totalorder %s20, 0
      %p41 = por %p39, %p40
      %p42 = scmp.ne.s32.totalorder %s28, %s29
      %p43 = scmp.eq.s32.totalorder %s21, 1
      %p44 = por %p42, %p43
      %p46 = scmp.ne.s32.totalorder %s29, %s45
      %p47 = scmp.eq.s32.totalorder %s21, 0
      %p48 = por %p46, %p47
      %s49 = ssub.s32 %s15, %s22
      %p50 = scmp.eq.s32.totalorder %s49, 0
      %s52 = sadd.s32 %s51, 1
      %s53 = scalar_select %p50, %s51, %s52
      %p56 = pneg %p50
      %p57 = scmp.eq.s32.totalorder %s15, 1
      %p58 = por %p56, %p57
      %p59 = scmp.ne.s32.totalorder %s51, %s54
      %p60 = scmp.eq.s32.totalorder %s15, 0
      %p61 = por %p59, %p60
      %p62 = scmp.ne.s32.totalorder %s51, %s54
      %p63 = scmp.eq.s32.totalorder %s20, 1
      %p64 = por %p62, %p63
      %p65 = scmp.ne.s32.totalorder %s54, %s55
      %p66 = scmp.eq.s32.totalorder %s20, 0
      %p67 = por %p65, %p66
      %p68 = scmp.ne.s32.totalorder %s54, %s55
      %p69 = scmp.eq.s32.totalorder %s21, 1
      %p70 = por %p68, %p69
      %p72 = scmp.ne.s32.totalorder %s55, %s71
      %p73 = scmp.eq.s32.totalorder %s21, 0
      %p74 = por %p72, %p73
      %s76 = sadd.s32 %s75, 1
      %p79 = scmp.eq.s32.totalorder %s15, 1
      %p80 = scmp.ne.s32.totalorder %s75, %s77
      %p81 = scmp.eq.s32.totalorder %s15, 0
      %p82 = por %p80, %p81
      %p83 = scmp.ne.s32.totalorder %s75, %s77
      %p84 = scmp.eq.s32.totalorder %s20, 1
      %p85 = por %p83, %p84
      %p86 = scmp.ne.s32.totalorder %s77, %s78
      %p87 = scmp.eq.s32.totalorder %s20, 0
      %p88 = por %p86, %p87
      %p89 = scmp.ne.s32.totalorder %s77, %s78
      %p90 = scmp.eq.s32.totalorder %s21, 1
      %p91 = por %p89, %p90
      %p93 = scmp.ne.s32.totalorder %s78, %s92
      %p94 = scmp.eq.s32.totalorder %s21, 0
      %p95 = por %p93, %p94
      %s97 = sadd.s32 %s96, 1
      %p100 = scmp.eq.s32.totalorder %s15, 1
      %p101 = scmp.ne.s32.totalorder %s96, %s98
      %p102 = scmp.eq.s32.totalorder %s15, 0
      %p103 = por %p101, %p102
      %p104 = scmp.ne.s32.totalorder %s96, %s98
      %p105 = scmp.eq.s32.totalorder %s20, 1
      %p106 = por %p104, %p105
      %p107 = scmp.ne.s32.totalorder %s98, %s99
      %p108 = scmp.eq.s32.totalorder %s20, 0
      %p109 = por %p107, %p108
      %p110 = scmp.ne.s32.totalorder %s98, %s99
      %p111 = scmp.eq.s32.totalorder %s21, 1
      %p112 = por %p110, %p111
      %p114 = scmp.ne.s32.totalorder %s99, %s113
      %p115 = scmp.eq.s32.totalorder %s21, 0
      %p116 = por %p114, %p115
      %s118 = sadd.s32 %s117, 1
      %p121 = scmp.eq.s32.totalorder %s15, 1
      %p122 = scmp.ne.s32.totalorder %s117, %s119
      %p123 = scmp.eq.s32.totalorder %s15, 0
      %p124 = por %p122, %p123
      %p125 = scmp.ne.s32.totalorder %s117, %s119
      %p126 = scmp.eq.s32.totalorder %s20, 1
      %p127 = por %p125, %p126
      %p128 = scmp.ne.s32.totalorder %s119, %s120
      %p129 = scmp.eq.s32.totalorder %s20, 0
      %p130 = por %p128, %p129
      %p131 = scmp.ne.s32.totalorder %s119, %s120
      %p132 = scmp.eq.s32.totalorder %s21, 1
      %p133 = por %p131, %p132
      %p135 = scmp.ne.s32.totalorder %s120, %s134
      %p136 = scmp.eq.s32.totalorder %s21, 0
      %p137 = por %p135, %p136
      %s139 = sadd.s32 %s138, 1
      %p142 = scmp.eq.s32.totalorder %s15, 1
      %p143 = scmp.ne.s32.totalorder %s138, %s140
      %p144 = scmp.eq.s32.totalorder %s15, 0
      %p145 = por %p143, %p144
      %p146 = scmp.ne.s32.totalorder %s138, %s140
      %p147 = scmp.eq.s32.totalorder %s20, 1
      %p148 = por %p146, %p147
      %p149 = scmp.ne.s32.totalorder %s140, %s141
      %p150 = scmp.eq.s32.totalorder %s20, 0
      %p151 = por %p149, %p150
      %p152 = scmp.ne.s32.totalorder %s140, %s141
      %p153 = scmp.eq.s32.totalorder %s21, 1
      %p154 = por %p152, %p153
      %p156 = scmp.ne.s32.totalorder %s141, %s155
      %p157 = scmp.eq.s32.totalorder %s21, 0
      %p158 = por %p156, %p157
      %s159 = ssub.s32 %s15, %s22
      %p160 = scmp.eq.s32.totalorder %s159, 0
      %s162 = sadd.s32 %s161, 1
      %s163 = scalar_select %p160, %s161, %s162
      %p166 = pneg %p160
      %p167 = scmp.eq.s32.totalorder %s15, 1
      %p168 = por %p166, %p167
      %p169 = scmp.ne.s32.totalorder %s161, %s164
      %p170 = scmp.eq.s32.totalorder %s15, 0
      %p171 = por %p169, %p170
      %p172 = scmp.ne.s32.totalorder %s161, %s164
      %p173 = scmp.eq.s32.totalorder %s20, 1
      %p174 = por %p172, %p173
      %p175 = scmp.ne.s32.totalorder %s164, %s165
      %p176 = scmp.eq.s32.totalorder %s20, 0
      %p177 = por %p175, %p176
      %p178 = scmp.ne.s32.totalorder %s164, %s165
      %p179 = scmp.eq.s32.totalorder %s21, 1
      %p180 = por %p178, %p179
      %p182 = scmp.ne.s32.totalorder %s165, %s181
      %p183 = scmp.eq.s32.totalorder %s21, 0
      %p184 = por %p182, %p183
      %p185 = scmp.le.s32.totalorder 1, %s15
      %p186 = scmp.lt.s32.totalorder %s15, 3
      %p187 = pnand %p185, %p186
      %p188 = pneg %p187
      // Predicated region
      $region9: #{attention_forward.1} parent=5 // pred_check
        _
      $region10: #{attention_forward.1} parent=5 // pred_check_branch
        %190 = sbr.rel (%p187) target = $region12
      $region11: #{attention_forward.1} parent=5 // pred_region
        %s191 = ssub.s32 %s15, 1
        // Predicated region
        $region13: #{attention_forward.1} parent=11 // pred_check
          %p192 = pneg %p88
        $region14: #{attention_forward.1} parent=11 // pred_check_branch
          %194 = sbr.rel (%p192) target = $region16
        $region15: #{attention_forward.1} parent=11 // pred_region
          _
        $region16: #{attention_forward.1} parent=11 // pred_fallthru
          _
        // Predicated region
        $region17: #{attention_forward.1} parent=11 // pred_check
          %p195 = pneg %p109
        $region18: #{attention_forward.1} parent=11 // pred_check_branch
          %197 = sbr.rel (%p195) target = $region20
        $region19: #{attention_forward.1} parent=11 // pred_region
          _
        $region20: #{attention_forward.1} parent=11 // pred_fallthru
          _
        // Predicated region
        $region21: #{attention_forward.1} parent=11 // pred_check
          %p198 = pneg %p130
        $region22: #{attention_forward.1} parent=11 // pred_check_branch
          %200 = sbr.rel (%p198) target = $region24
        $region23: #{attention_forward.1} parent=11 // pred_region
          _
        $region24: #{attention_forward.1} parent=11 // pred_fallthru
          _
        // Predicated region
        $region25: #{attention_forward.1} parent=11 // pred_check
          %p201 = pneg %p151
        $region26: #{attention_forward.1} parent=11 // pred_check_branch
          %203 = sbr.rel (%p201) target = $region28
        $region27: #{attention_forward.1} parent=11 // pred_region
          _
        $region28: #{attention_forward.1} parent=11 // pred_fallthru
          _
      $region12: #{attention_forward.1} parent=5 // pred_fallthru
        _
      %p204 = scmp.lt.s32.totalorder %s15, 2
      // Predicated region
      $region29: #{attention_forward.1} parent=5 // pred_check
        %p205 = pneg %p204
      $region30: #{attention_forward.1} parent=5 // pred_check_branch
        %207 = sbr.rel (%p205) target = $region32
      $region31: #{attention_forward.1} parent=5 // pred_region
        // Predicated region
        $region33: #{attention_forward.1} parent=31 // pred_check
          %p208 = pneg %p35
        $region34: #{attention_forward.1} parent=31 // pred_check_branch
          %210 = sbr.rel (%p208) target = $region36
        $region35: #{attention_forward.1} parent=31 // pred_region
          %p211 = scmp.lt.s32.totalorder %s15, 1
          %s212 = scalar_select %p211, %s15, 1
          %s213 = smul.addr %s212, 8
          %s214 = scalar_lea.vmem %s0, %s213
        $region36: #{attention_forward.1} parent=31 // pred_fallthru
          _
        // Predicated region
        $region37: #{attention_forward.1} parent=31 // pred_check
          %p215 = pneg %p61
        $region38: #{attention_forward.1} parent=31 // pred_check_branch
          %217 = sbr.rel (%p215) target = $region40
        $region39: #{attention_forward.1} parent=31 // pred_region
          %p218 = scmp.lt.s32.totalorder %s15, 1
          %s219 = scalar_select %p218, %s15, 1
          %s220 = scalar_lea.vmem %s1, %s219
        $region40: #{attention_forward.1} parent=31 // pred_fallthru
          _
      $region32: #{attention_forward.1} parent=5 // pred_fallthru
        _
      %p221 = scmp.le.s32.totalorder 1, %s15
      %p222 = scmp.lt.s32.totalorder %s15, 3
      %p223 = pnand %p221, %p222
      %p224 = pneg %p223
      // Predicated region
      $region41: #{attention_forward.1} parent=5 // pred_check
        _
      $region42: #{attention_forward.1} parent=5 // pred_check_branch
        %226 = sbr.rel (%p223) target = $region44
      $region43: #{attention_forward.1} parent=5 // pred_region
        %s227 = ssub.s32 %s15, 1
        %p228 = scmp.lt.s32.totalorder %s20, 1
        %s229 = scalar_select %p228, %s20, 1
        %s230 = smul.addr %s229, 8
        %s231 = scalar_lea.vmem %s0, %s230
        %p232 = pneg %p41
        %p233 = pneg %p38
        %p234 = scmp.lt.s32.totalorder %s20, 1
        %s235 = scalar_select %p234, %s20, 1
        %s236 = scalar_lea.vmem %s1, %s235
        %p237 = pneg %p67
        %p238 = pneg %p64
        %p239 = pneg %p88
        %p240 = pneg %p85
        %p241 = pneg %p109
        %p242 = pneg %p106
        %p243 = pneg %p130
        %p244 = pneg %p127
        %p245 = pneg %p151
        %p246 = pneg %p148
        %p247 = pneg %p177
        %p248 = pneg %p174
        %s249 = sand.u32 %s164, 1
        %s250 = scalar_lea.sflag [#allocation3], %s249
        %s251 = sand.u32 %s164, 1
        %s252 = scalar_lea.vmem [#allocation2], %s251
        %p253 = scmp.lt.s32.totalorder %s20, 1
        %s254 = scalar_select %p253, %s20, 1
        %s255 = smul.addr %s254, 8
        %s256 = scalar_lea.vmem %s0, %s255
        %p257 = scmp.lt.s32.totalorder %s20, 1
        %s258 = scalar_select %p257, %s20, 1
        %s259 = scalar_lea.vmem %s1, %s258
        %v260 = vld [vmem:[%s256] sm:$0xff]
        %v261 = vld [vmem:[%s259] sm:$0x1]
        %v262 = vld [vmem:[%s2] sm:$0xff]
        %v263 = vld [vmem:[%s2 + $0x8] sm:$0xff]
        %v264 = vld [vmem:[%s2 + $0x10] sm:$0xff]
        %v265 = vld [vmem:[%s2 + $0x18] sm:$0xff]
        %v266 = vld [vmem:[%s3] sm:$0x1]
        %v268 = vlaneseq
        %v269 = vshrl.u32 %v268, 7
        %v270 = vsub.s32 0, %v269
        %v271 = vrot.slane %v266, %v270
        %vm273 = vcmask 261120
        %v275 = vsel %vm273, %v260, 0
        %277 = vmatprep.subr.mxu0 0.0
        %278 = vmatpush1.msra.mxu0 0.0
        %279 = vmatprep.subr.mxu0 0.0
        %280 = vmatpush1.msra.mxu0 0.0
        %281 = vmatprep.subr.mxu0 0.0
        %282 = vmatpush1.msra.mxu0 0.0
        %283 = vmatprep.subr.mxu0 0.0
        %284 = vmatpush1.msra.mxu0 0.0
        %285 = vmatprep.subr.mxu0 0.0
        %286 = vmatpush1.msra.mxu0 0.0
        %287 = vmatprep.subr.mxu0 0.0
        %288 = vmatpush1.msra.mxu0 0.0
        %289 = vmatprep.subr.mxu0 0.0
        %290 = vmatpush1.msra.mxu0 0.0
        %291 = vmatprep.subr.mxu0 0.0
        %292 = vmatpush1.msra.mxu0 0.0
        %293 = vmatprep.subr.mxu0 0.0
        %294 = vmatpush1.msra.mxu0 0.0
        %295 = vmatprep.subr.mxu0 0.0
        %296 = vmatpush1.msra.mxu0 0.0
        %297 = vmatprep.subr.mxu0 0.0
        %298 = vmatpush1.msra.mxu0 0.0
        %299 = vmatprep.subr.mxu0 0.0
        %300 = vmatpush1.msra.mxu0 0.0
        %301 = vmatprep.subr.mxu0 0.0
        %302 = vmatpush1.msra.mxu0 %v265
        %303 = vmatprep.subr.mxu0 0.0
        %304 = vmatpush1.msra.mxu0 %v264
        %305 = vmatprep.subr.mxu0 0.0
        %306 = vmatpush1.msra.mxu0 %v263
        %307 = vmatprep.subr.mxu0 0.0
        %308 = vmatpush1.msra.mxu0 %v262
        %309 = vmatprep.subr.mxu0 0.0
        %310 = vmatpush2.msra.mxu0 0.0
        %311 = vmatprep.subr.mxu0 0.0
        %312 = vmatpush2.msra.mxu0 0.0
        %313 = vmatprep.subr.mxu0 0.0
        %314 = vmatpush2.msra.mxu0 0.0
        %315 = vmatprep.subr.mxu0 0.0
        %316 = vmatpush2.msra.mxu0 0.0
        %317 = vmatprep.subr.mxu0 0.0
        %318 = vmatpush2.msra.mxu0 0.0
        %319 = vmatprep.subr.mxu0 0.0
        %320 = vmatpush2.msra.mxu0 0.0
        %321 = vmatprep.subr.mxu0 0.0
        %322 = vmatpush2.msra.mxu0 0.0
        %323 = vmatprep.subr.mxu0 0.0
        %324 = vmatpush2.msra.mxu0 0.0
        %325 = vmatprep.subr.mxu0 0.0
        %326 = vmatpush2.msra.mxu0 0.0
        %327 = vmatprep.subr.mxu0 0.0
        %328 = vmatpush2.msra.mxu0 0.0
        %329 = vmatprep.subr.mxu0 0.0
        %330 = vmatpush2.msra.mxu0 0.0
        %331 = vmatprep.subr.mxu0 0.0
        %332 = vmatpush2.msra.mxu0 0.0
        %333 = vmatprep.subr.mxu0 0.0
        %334 = vmatpush2.msra.mxu0 0.0
        %335 = vmatprep.subr.mxu0 0.0
        %336 = vmatpush2.msra.mxu0 0.0
        %337 = vmatprep.subr.mxu0 0.0
        %338 = vmatpush2.msra.mxu0 0.0
        %339 = vmatprep.subr.mxu0 0.0
        %340 = vmatpush2.msra.mxu0 0.0
        %341 = vmatprep.mubr.f32.mxu0 0.0
        %342 = vmatmul.mubr.f32.gmra.mxu0 %v275
        %v343 = vpop.f32.mrf.mxu0
        %v344 = vadd.f32 %v271, %v343
        %v345 = vpop.f32.mrf.mxu0
        %346 = vdwg.mxu0
        %v347 = vld [vmem:[%s4] sm:$0xff]
        %v348 = vld [vmem:[%s4 + $0x8] sm:$0xff]
        %v349 = vld [vmem:[%s4 + $0x10] sm:$0xff]
        %v350 = vld [vmem:[%s4 + $0x18] sm:$0xff]
        %v351 = vld [vmem:[%s5] sm:$0x1]
        %v353 = vsel %vm273, %v261, 0
        %355 = vmatprep.subr.mxu0 0.0
        %356 = vmatpush1.msra.mxu0 0.0
        %357 = vmatprep.subr.mxu0 0.0
        %358 = vmatpush1.msra.mxu0 0.0
        %359 = vmatprep.subr.mxu0 0.0
        %360 = vmatpush1.msra.mxu0 0.0
        %361 = vmatprep.subr.mxu0 0.0
        %362 = vmatpush1.msra.mxu0 0.0
        %363 = vmatprep.subr.mxu0 0.0
        %364 = vmatpush1.msra.mxu0 0.0
        %365 = vmatprep.subr.mxu0 0.0
        %366 = vmatpush1.msra.mxu0 0.0
        %367 = vmatprep.subr.mxu0 0.0
        %368 = vmatpush1.msra.mxu0 0.0
        %369 = vmatprep.subr.mxu0 0.0
        %370 = vmatpush1.msra.mxu0 0.0
        %371 = vmatprep.subr.mxu0 0.0
        %372 = vmatpush1.msra.mxu0 0.0
        %373 = vmatprep.subr.mxu0 0.0
        %374 = vmatpush1.msra.mxu0 0.0
        %375 = vmatprep.subr.mxu0 0.0
        %376 = vmatpush1.msra.mxu0 0.0
        %377 = vmatprep.subr.mxu0 0.0
        %378 = vmatpush1.msra.mxu0 0.0
        %379 = vmatprep.subr.mxu0 0.0
        %380 = vmatpush1.msra.mxu0 %v350
        %381 = vmatprep.subr.mxu0 0.0
        %382 = vmatpush1.msra.mxu0 %v349
        %383 = vmatprep.subr.mxu0 0.0
        %384 = vmatpush1.msra.mxu0 %v348
        %385 = vmatprep.subr.mxu0 0.0
        %386 = vmatpush1.msra.mxu0 %v347
        %387 = vmatprep.subr.mxu0 0.0
        %388 = vmatpush2.msra.mxu0 0.0
        %389 = vmatprep.subr.mxu0 0.0
        %390 = vmatpush2.msra.mxu0 0.0
        %391 = vmatprep.subr.mxu0 0.0
        %392 = vmatpush2.msra.mxu0 0.0
        %393 = vmatprep.subr.mxu0 0.0
        %394 = vmatpush2.msra.mxu0 0.0
        %395 = vmatprep.subr.mxu0 0.0
        %396 = vmatpush2.msra.mxu0 0.0
        %397 = vmatprep.subr.mxu0 0.0
        %398 = vmatpush2.msra.mxu0 0.0
        %399 = vmatprep.subr.mxu0 0.0
        %400 = vmatpush2.msra.mxu0 0.0
        %401 = vmatprep.subr.mxu0 0.0
        %402 = vmatpush2.msra.mxu0 0.0
        %403 = vmatprep.subr.mxu0 0.0
        %404 = vmatpush2.msra.mxu0 0.0
        %405 = vmatprep.subr.mxu0 0.0
        %406 = vmatpush2.msra.mxu0 0.0
        %407 = vmatprep.subr.mxu0 0.0
        %408 = vmatpush2.msra.mxu0 0.0
        %409 = vmatprep.subr.mxu0 0.0
        %410 = vmatpush2.msra.mxu0 0.0
        %411 = vmatprep.subr.mxu0 0.0
        %412 = vmatpush2.msra.mxu0 0.0
        %413 = vmatprep.subr.mxu0 0.0
        %414 = vmatpush2.msra.mxu0 0.0
        %415 = vmatprep.subr.mxu0 0.0
        %416 = vmatpush2.msra.mxu0 0.0
        %417 = vmatprep.subr.mxu0 0.0
        %418 = vmatpush2.msra.mxu0 0.0
        %419 = vmatprep.mubr.f32.mxu0 0.0
        %420 = vmatmul.mubr.f32.gmra.mxu0 %v353
        %v421 = vpop.f32.mrf.mxu0
        %v422 = vadd.f32 %v351, %v421
        %v423 = vpop.f32.mrf.mxu0
        %424 = vdwg.mxu0
        %v425 = vlaneseq
        %v426 = vshrl.u32 %v425, 7
        %v427 = vsub.s32 0, %v426
        %v428 = vrot.slane %v422, %v427
        %v429 = vmul.f32 %v344, %v428
        %v430 = vsel %vm273, %v429, 0.0
        %431 = vadd.xlane.f32.xlu0 %v430
        %v432 = vpop.xlane.xlu0 %431
        %v433 = vrot.slane %v432, 4
        %v434 = vmax.f32 %v432, %v433
        %v435 = vrot.slane %v434, 2
        %v436 = vmax.f32 %v434, %v435
        %v437 = vrot.slane %v436, 1
        %v438 = vmax.f32 %v436, %v437
        %v439 = vsub.f32 %v432, %v438
        %v440 = vmul.f32 %v439, 1.442695
        %v441 = vpow.pop %v440
        %v442 = vrot.slane %v441, 4
        %v443 = vadd.f32 %v441, %v442
        %v444 = vrot.slane %v443, 2
        %v445 = vadd.f32 %v443, %v444
        %v446 = vrot.slane %v445, 1
        %v447 = vadd.f32 %v445, %v446
        %v448 = vrcp.pop %v447
        %v449 = vmul.f32 %v441, %v448
        %450 = vxpose.xlu0.b32.start [1/16] %v449, 128
        %451 = vxpose.xlu0.b32.cont [2/16] 0.0, 128
        %452 = vxpose.xlu0.b32.cont [3/16] 0.0, 128
        %453 = vxpose.xlu0.b32.cont [4/16] 0.0, 128
        %454 = vxpose.xlu0.b32.cont [5/16] 0.0, 128
        %455 = vxpose.xlu0.b32.cont [6/16] 0.0, 128
        %456 = vxpose.xlu0.b32.cont [7/16] 0.0, 128
        %457 = vxpose.xlu0.b32.cont [8/16] 0.0, 128
        %458 = vxpose.xlu0.b32.cont [9/16] 0.0, 128
        %459 = vxpose.xlu0.b32.cont [10/16] 0.0, 128
        %460 = vxpose.xlu0.b32.cont [11/16] 0.0, 128
        %461 = vxpose.xlu0.b32.cont [12/16] 0.0, 128
        %462 = vxpose.xlu0.b32.cont [13/16] 0.0, 128
        %463 = vxpose.xlu0.b32.cont [14/16] 0.0, 128
        %464 = vxpose.xlu0.b32.cont [15/16] 0.0, 128
        %465 = vxpose.xlu0.b32.end [16/16] 0.0, 128
        %v466 = vpop.trf.xlu0
        %v467 = vpop.trf.xlu0
        %v468 = vpop.trf.xlu0
        %v469 = vpop.trf.xlu0
        %v470 = vpop.trf.xlu0
        %v471 = vpop.trf.xlu0
        %v472 = vpop.trf.xlu0
        %v473 = vpop.trf.xlu0
        %v474 = vpop.trf.xlu0
        %v475 = vpop.trf.xlu0
        %v476 = vpop.trf.xlu0
        %v477 = vpop.trf.xlu0
        %v478 = vpop.trf.xlu0
        %v479 = vpop.trf.xlu0
        %v480 = vpop.trf.xlu0
        %v481 = vpop.trf.xlu0
        %vm482 = vcmask 64512
        %v484 = vsel %vm482, %v466, 0
        %486 = vmatprep.subr.mxu0 0.0
        %487 = vmatpush1.msra.mxu0 0.0
        %488 = vmatprep.subr.mxu0 0.0
        %489 = vmatpush1.msra.mxu0 0.0
        %490 = vmatprep.subr.mxu0 0.0
        %491 = vmatpush1.msra.mxu0 0.0
        %492 = vmatprep.subr.mxu0 0.0
        %493 = vmatpush1.msra.mxu0 0.0
        %494 = vmatprep.subr.mxu0 0.0
        %495 = vmatpush1.msra.mxu0 0.0
        %496 = vmatprep.subr.mxu0 0.0
        %497 = vmatpush1.msra.mxu0 0.0
        %498 = vmatprep.subr.mxu0 0.0
        %499 = vmatpush1.msra.mxu0 0.0
        %500 = vmatprep.subr.mxu0 0.0
        %501 = vmatpush1.msra.mxu0 0.0
        %502 = vmatprep.subr.mxu0 0.0
        %503 = vmatpush1.msra.mxu0 0.0
        %504 = vmatprep.subr.mxu0 0.0
        %505 = vmatpush1.msra.mxu0 0.0
        %506 = vmatprep.subr.mxu0 0.0
        %507 = vmatpush1.msra.mxu0 0.0
        %508 = vmatprep.subr.mxu0 0.0
        %509 = vmatpush1.msra.mxu0 0.0
        %510 = vmatprep.subr.mxu0 0.0
        %511 = vmatpush1.msra.mxu0 0.0
        %512 = vmatprep.subr.mxu0 0.0
        %513 = vmatpush1.msra.mxu0 0.0
        %514 = vmatprep.subr.mxu0 0.0
        %515 = vmatpush1.msra.mxu0 0.0
        %516 = vmatprep.subr.mxu0 0.0
        %517 = vmatpush1.msra.mxu0 %v344
        %518 = vmatprep.subr.mxu0 0.0
        %519 = vmatpush2.msra.mxu0 0.0
        %520 = vmatprep.subr.mxu0 0.0
        %521 = vmatpush2.msra.mxu0 0.0
        %522 = vmatprep.subr.mxu0 0.0
        %523 = vmatpush2.msra.mxu0 0.0
        %524 = vmatprep.subr.mxu0 0.0
        %525 = vmatpush2.msra.mxu0 0.0
        %526 = vmatprep.subr.mxu0 0.0
        %527 = vmatpush2.msra.mxu0 0.0
        %528 = vmatprep.subr.mxu0 0.0
        %529 = vmatpush2.msra.mxu0 0.0
        %530 = vmatprep.subr.mxu0 0.0
        %531 = vmatpush2.msra.mxu0 0.0
        %532 = vmatprep.subr.mxu0 0.0
        %533 = vmatpush2.msra.mxu0 0.0
        %534 = vmatprep.subr.mxu0 0.0
        %535 = vmatpush2.msra.mxu0 0.0
        %536 = vmatprep.subr.mxu0 0.0
        %537 = vmatpush2.msra.mxu0 0.0
        %538 = vmatprep.subr.mxu0 0.0
        %539 = vmatpush2.msra.mxu0 0.0
        %540 = vmatprep.subr.mxu0 0.0
        %541 = vmatpush2.msra.mxu0 0.0
        %542 = vmatprep.subr.mxu0 0.0
        %543 = vmatpush2.msra.mxu0 0.0
        %544 = vmatprep.subr.mxu0 0.0
        %545 = vmatpush2.msra.mxu0 0.0
        %546 = vmatprep.subr.mxu0 0.0
        %547 = vmatpush2.msra.mxu0 0.0
        %548 = vmatprep.subr.mxu0 0.0
        %549 = vmatpush2.msra.mxu0 0.0
        %550 = vmatprep.mubr.f32.mxu0 0.0
        %551 = vmatmul.mubr.f32.gmra.mxu0 %v484
        %v552 = vpop.f32.mrf.mxu0
        %v553 = vadd.f32 0.0, %v552
        %v554 = vpop.f32.mrf.mxu0
        %555 = vdwg.mxu0
        %vm556 = vcmask 253952
        %557 = vst.msk [vmem:[%s252] sm:$0x1] %vm556, %v553
        %s558 = sand.u32 %s164, 1
        %s559 = scalar_lea.sflag [#allocation3], %s558
        %s560 = sand.u32 %s164, 1
        %s561 = scalar_lea.vmem [#allocation2], %s560
        // Predicated region
        $region45: #{attention_forward.1} parent=43 // pred_check
          %p562 = pneg %p174
        $region46: #{attention_forward.1} parent=43 // pred_check_branch
          %564 = sbr.rel (%p562) target = $region48
        $region47: #{attention_forward.1} parent=43 // pred_region
          %s566 = ssub.s32 16, 16
          %567 = vsyncadd %s559, %s566
          %s568 = smul.addr %s20, 16
          %s569 = scalar_lea.hbm %s6, %s568
          %s571 = sshll.u32 %s561, 4
          %s572 = int_to_ptr.vmem [resolvable:$true] %s571
          %574 = dma.vmem_to_hbm [thread:$0]  %s572, 16, %s569, %s559
        $region48: #{attention_forward.1} parent=43 // pred_fallthru
          _
      $region44: #{attention_forward.1} parent=5 // pred_fallthru
        _
      %p575 = scmp.le.s32.totalorder 2, %s15
      // Predicated region
      $region49: #{attention_forward.1} parent=5 // pred_check
        %p576 = pneg %p575
      $region50: #{attention_forward.1} parent=5 // pred_check_branch
        %578 = sbr.rel (%p576) target = $region52
      $region51: #{attention_forward.1} parent=5 // pred_region
        %s579 = ssub.s32 %s15, 2
        // Predicated region
        $region53: #{attention_forward.1} parent=51 // pred_check
          %p580 = pneg %p180
        $region54: #{attention_forward.1} parent=51 // pred_check_branch
          %582 = sbr.rel (%p580) target = $region56
        $region55: #{attention_forward.1} parent=51 // pred_region
          %s583 = sand.u32 %s165, 1
          %s584 = scalar_lea.sflag [#allocation3], %s583
          %s585 = sand.u32 %s165, 1
          %s586 = scalar_lea.vmem [#allocation2], %s585
          %587 = dma.done %s584, 16
        $region56: #{attention_forward.1} parent=51 // pred_fallthru
          _
      $region52: #{attention_forward.1} parent=5 // pred_fallthru
        _
    $region6: #{attention_forward.1} parent=1 // loop_footer
      %s19 = sadd.s32 1, %s15
    $region7: #{attention_forward.1} parent=1 // loop_footer_branch
      %14 = sbr.rel target = $region3
    $region8: #{attention_forward.1} parent=1 // loop_exit
      _
    %588 = vsyncpa [#allocation3], 1
    %s589 = scalar_lea.sflag [#allocation3], 1
    %590 = vsyncpa %s589, 1

</llo_original>
